<compile_context>
chip_gen: v6e
topology: v6e:2x2x1
jax: 0.10.0
libtpu: 0.0.40
codegen_flags: <defaults>
</compile_context>

<pallas_src>
import functools

import jax
import jax.numpy as jnp
from jax import lax
from jax.experimental import pallas as pl
from jax.experimental.pallas import tpu as pltpu


def _round_up(a: int, b: int) -> int:
    return -(-a // b) * b


def _vmem_limit(nbytes: int) -> int:
    # Footprint-derived scoped-VMEM request, clamped to [32 MiB, 64 MiB] so it
    # is always valid on v7x (64 MiB/TC) and never starves v5e/v6e pipelining.
    return int(min(64 << 20, max(32 << 20, int(nbytes * 1.5) + (2 << 20))))


# --------------------------------------------------------------------------
# Kernel 1: fused Q/K/V projection.  x:(tq, d_in) f32  x  W:(d_pad, d_in) bf16
#           -> one (tq, d_pad) bf16 column-block of the fused qkv buffer.
# Weights stay in PyTorch (d_out, d_in) layout; contraction is over d_in of
# both operands, so no transpose / relayout is ever materialized.
# TODO(synk): d_in is kept as a single (untiled) contraction block; tile it
#             with an f32 accumulator if d_in grows beyond a few thousand.
# --------------------------------------------------------------------------
def _qkv_proj_kernel(x_ref, w_ref, o_ref):
    xb = x_ref[...].astype(jnp.bfloat16)            # bf16 MXU operand
    o_ref[...] = lax.dot_general(
        xb, w_ref[...],
        dimension_numbers=(((1,), (1,)), ((), ())),  # contract d_in with d_in
        preferred_element_type=jnp.float32,
    ).astype(o_ref.dtype)


# --------------------------------------------------------------------------
# Kernel 2: flash attention over precomputed Q/K/V tiles (online softmax).
# grid = (q_tiles, kv_tiles); output block resident across the kv axis.
# --------------------------------------------------------------------------
def _flash_attn_kernel(q_ref, k_ref, v_ref, o_ref, m_scr, l_scr, acc_scr, *,
                       kv_len, block_k, need_mask):
    j = pl.program_id(1)

    @pl.when(j == 0)
    def _init():
        m_scr[...] = jnp.full_like(m_scr, -jnp.inf)
        l_scr[...] = jnp.zeros_like(l_scr)
        acc_scr[...] = jnp.zeros_like(acc_scr)

    # Scores: contract the last dims of Q and K directly (no K^T relayout).
    # Q is pre-scaled by 1/sqrt(d_out) (folded into Wq at weight-prep time).
    s = lax.dot_general(
        q_ref[...], k_ref[...],
        dimension_numbers=(((1,), (1,)), ((), ())),
        preferred_element_type=jnp.float32,
    )                                                # (tq, tk) f32

    if need_mask:  # static: only emitted when seq was padded
        col = block_k * j + lax.broadcasted_iota(jnp.int32, s.shape, 1)
        s = jnp.where(col < kv_len, s, -jnp.inf)

    # Online softmax update (softmax over keys == torch dim=1).
    m_prev = m_scr[...]
    m_new = jnp.maximum(m_prev, s.max(axis=-1, keepdims=True))
    alpha = jnp.exp(m_prev - m_new)
    p = jnp.exp(s - m_new)                           # f32 exp (safe on v5e too)
    l_scr[...] = alpha * l_scr[...] + p.sum(axis=-1, keepdims=True)
    acc_scr[...] = alpha * acc_scr[...] + jnp.dot(
        p.astype(v_ref.dtype), v_ref[...],           # bf16 MXU operands
        preferred_element_type=jnp.float32)
    m_scr[...] = m_new

    @pl.when(j == pl.num_programs(1) - 1)
    def _finalize():
        # Exact division (no approx reciprocal) for parity with the reference.
        o_ref[...] = (acc_scr[...] / l_scr[...]).astype(o_ref.dtype)


# --------------------------------------------------------------------------
# One-time weight preparation: pad d_out -> multiple of 128 (lane-dense),
# fold the 1/sqrt(d_out) score scale into Wq, fuse [Wq; Wk; Wv], cast to bf16.
# Done ONCE at init, never per forward call.
# --------------------------------------------------------------------------
def prepare_qkv_weights(w_query, w_key, w_value):
    d_out, d_in = w_query.shape
    d_pad = _round_up(d_out, 128)
    pad = d_pad - d_out
    scale = float(d_out) ** -0.5
    wq = jnp.pad(w_query * scale, ((0, pad), (0, 0)))
    wk = jnp.pad(w_key, ((0, pad), (0, 0)))
    wv = jnp.pad(w_value, ((0, pad), (0, 0)))
    return jnp.concatenate([wq, wk, wv], axis=0).astype(jnp.bfloat16)


def self_attention_v2(x, w_qkv, d_out, *, tile_q=256, tile_k=512):
    """x: (seq, d_in); w_qkv: prepare_qkv_weights output, (3*d_pad, d_in) bf16."""
    seq, d_in = x.shape
    assert w_qkv.shape[1] == d_in
    d_pad = w_qkv.shape[0] // 3
    assert d_pad * 3 == w_qkv.shape[0] and d_out <= d_pad

    # ---- tile selection & sequence padding (no full-sequence fallback) ----
    seq8 = _round_up(seq, 8)
    tq = min(tile_q, seq8)
    seq_pad = _round_up(seq8, tq)                       # tq | seq_pad
    tk = tile_k if (seq_pad >= tile_k and seq_pad % tile_k == 0) else tq
    if seq_pad != seq:
        x = jnp.pad(x, ((0, seq_pad - seq), (0, 0)))    # zero rows -> masked

    xbytes = x.dtype.itemsize

    # ---- kernel 1: fused QKV projection -> (seq_pad, 3*d_pad) bf16 ----
    proj_bytes = (2 * tq * d_in * xbytes        # x tiles (double-buffered)
                  + 2 * d_pad * d_in * 2        # weight column-block
                  + 2 * tq * d_pad * 2)         # output tiles
    qkv = pl.pallas_call(
        _qkv_proj_kernel,
        out_shape=jax.ShapeDtypeStruct((seq_pad, 3 * d_pad), jnp.bfloat16),
        grid_spec=pltpu.PrefetchScalarGridSpec(
            num_scalar_prefetch=0,
            grid=(seq_pad // tq, 3),
            in_specs=[
                pl.BlockSpec((tq, d_in), lambda i, j: (i, 0)),     # x rows
                pl.BlockSpec((d_pad, d_in), lambda i, j: (j, 0)),  # Wq/Wk/Wv
            ],
            out_specs=pl.BlockSpec((tq, d_pad), lambda i, j: (i, j)),
        ),
        compiler_params=pltpu.CompilerParams(
            dimension_semantics=("parallel", "parallel"),
            vmem_limit_bytes=_vmem_limit(proj_bytes),
        ),
    )(x, w_qkv)

    # ---- kernel 2: flash attention streaming (tile, d_pad) Q/K/V tiles ----
    kernel = functools.partial(
        _flash_attn_kernel, kv_len=seq, block_k=tk,
        need_mask=(seq_pad != seq))
    attn_bytes = (2 * tq * d_pad * 2            # Q tile
                  + 2 * 2 * tk * d_pad * 2      # K and V tiles
                  + 2 * tq * d_pad * xbytes     # output tile
                  + tq * d_pad * 4              # acc scratch
                  + 2 * tq * 128 * 4)           # m/l scratch (padded)
    out_padded = pl.pallas_call(
        kernel,
        out_shape=jax.ShapeDtypeStruct((seq_pad, d_pad), x.dtype),
        grid_spec=pltpu.PrefetchScalarGridSpec(
            num_scalar_prefetch=0,
            grid=(seq_pad // tq, seq_pad // tk),
            in_specs=[
                pl.BlockSpec((tq, d_pad), lambda i, j: (i, 0)),   # Q columns
                pl.BlockSpec((tk, d_pad), lambda i, j: (j, 1)),   # K columns
                pl.BlockSpec((tk, d_pad), lambda i, j: (j, 2)),   # V columns
            ],
            out_specs=pl.BlockSpec((tq, d_pad), lambda i, j: (i, 0)),
            scratch_shapes=[
                pltpu.VMEM((tq, 1), jnp.float32),      # running max
                pltpu.VMEM((tq, 1), jnp.float32),      # running denom
                pltpu.VMEM((tq, d_pad), jnp.float32),  # output accumulator
            ],
        ),
        compiler_params=pltpu.CompilerParams(
            dimension_semantics=("parallel", "arbitrary"),
            vmem_limit_bytes=_vmem_limit(attn_bytes),
        ),
    )(qkv, qkv, qkv)

    out = out_padded[:seq] if seq_pad != seq else out_padded
    return out[:, :d_out] if d_pad != d_out else out


def _reference(x, w_query, w_key, w_value):
    # Pure-JAX reference mirroring the PyTorch forward exactly (f32).
    q = x @ w_query.T
    k = x @ w_key.T
    v = x @ w_value.T
    scores = q @ k.T
    weights = jax.nn.softmax(scores / (k.shape[-1] ** 0.5), axis=1)
    return weights @ v


if __name__ == "__main__":
    # Small shapes consistent with the module: seq=8 tokens, d_in=32, d_out=16.
    seq, d_in, d_out = 8, 32, 16

    key = jax.random.PRNGKey(0)
    kx, kq, kk, kv = jax.random.split(key, 4)

    x = jax.random.normal(kx, (seq, d_in), dtype=jnp.float32)
    # Deterministic "Linear" weights, PyTorch layout (d_out, d_in); qkv_bias=False.
    w_query = jax.random.normal(kq, (d_out, d_in), dtype=jnp.float32) * 0.1
    w_key = jax.random.normal(kk, (d_out, d_in), dtype=jnp.float32) * 0.1
    w_value = jax.random.normal(kv, (d_out, d_in), dtype=jnp.float32) * 0.1

    # Weight padding / fusion / scale-fold / bf16 cast happens ONCE here.
    w_qkv = prepare_qkv_weights(w_query, w_key, w_value)

    out = self_attention_v2(x, w_qkv, d_out)
    out = jax.block_until_ready(out)

    ref = _reference(x, w_query, w_key, w_value)
    assert out.shape == (seq, d_out)
    # Tolerance accounts for bf16 MXU operands vs. the all-f32 reference.
    assert jnp.allclose(out, ref, atol=2e-2, rtol=2e-2), (
        float(jnp.max(jnp.abs(out - ref))))

    print("KERNEL_OK")
</pallas_src>

<mosaic_0001>
module attributes {stable_mosaic.version = 11 : i64} {
  func.func @_qkv_proj_kernel(%arg0: i32, %arg1: i32, %arg2: memref<8x32xf32, #tpu.memory_space<vmem>>, %arg3: memref<128x32xbf16, #tpu.memory_space<vmem>>, %arg4: memref<8x128xbf16, #tpu.memory_space<vmem>>) attributes {dimension_semantics = [#tpu.dimension_semantics<parallel>, #tpu.dimension_semantics<parallel>], iteration_bounds = array<i64: 1, 3>, scalar_prefetch = 0 : i64, scratch_operands = 0 : i64, tpu.core_type = #tpu.core_type<tc>, window_params = [{transform_indices = @transform_0, window_bounds = array<i64: 8, 32>}, {transform_indices = @transform_1, window_bounds = array<i64: 128, 32>}, {transform_indices = @transform_2, window_bounds = array<i64: 8, 128>}]} {
    %c0 = arith.constant 0 : index
    %c0_0 = arith.constant 0 : index
    %0 = vector.load %arg2[%c0, %c0_0] : memref<8x32xf32, #tpu.memory_space<vmem>>, vector<8x32xf32>
    %1 = arith.truncf %0 : vector<8x32xf32> to vector<8x32xbf16>
    %c0_1 = arith.constant 0 : index
    %c0_2 = arith.constant 0 : index
    %2 = vector.load %arg3[%c0_1, %c0_2] : memref<128x32xbf16, #tpu.memory_space<vmem>>, vector<128x32xbf16>
    %cst = arith.constant dense<0.000000e+00> : vector<8x128xf32>
    %3 = tpu.matmul %1, %2, %cst {dimension_numbers = #tpu.dot_dimension_numbers<[1], [1], [0], [0], [0, 0, 1, 0], [], []>} : vector<8x32xbf16>, vector<128x32xbf16>, vector<8x128xf32> -> vector<8x128xf32>
    %4 = arith.truncf %3 : vector<8x128xf32> to vector<8x128xbf16>
    %c0_3 = arith.constant 0 : index
    %c0_4 = arith.constant 0 : index
    %5 = vector.load %arg4[%c0_3, %c0_4] : memref<8x128xbf16, #tpu.memory_space<vmem>>, vector<8x128xbf16>
    tpu.vector_store %arg4[%c0_3, %c0_4], %4 {strides = array<i32>} : memref<8x128xbf16, #tpu.memory_space<vmem>>, vector<8x128xbf16>,
    return
  }
  func.func @transform_0(%arg0: i32, %arg1: i32) -> (i32, i32) {
    %c0_i32 = arith.constant 0 : i32
    %c0_i32_0 = arith.constant 0 : i32
    return %arg0, %c0_i32 : i32, i32
  }
  func.func @transform_1(%arg0: i32, %arg1: i32) -> (i32, i32) {
    %c0_i32 = arith.constant 0 : i32
    %c0_i32_0 = arith.constant 0 : i32
    return %arg1, %c0_i32 : i32, i32
  }
  func.func @transform_2(%arg0: i32, %arg1: i32) -> (i32, i32) {
    %c0_i32 = arith.constant 0 : i32
    return %arg0, %arg1 : i32, i32
  }
}

</mosaic_0001>

<llo_original>
// kernel: tpu_custom_call.1
$region0: #{tpu_custom_call.1}
  #allocation0 [shape = 'u32[]', space=smem, size = 0x4, offset = 0x4, fixed_abs, tag = 'smem constant byte address 0x4 - core index']
  #allocation1 [shape = 'u32[144,128]{1,0:T(1,128)}', space=vmem, size = 0x12000, scoped, tag = 'internal scratch']
  %s0 = inlined_call_operand.vmem [shape: f32[8,32], index: 0, kind: input, shape index: {}]
  %s1 = inlined_call_operand.vmem [shape: bf16[384,32], index: 1, kind: input, shape index: {}]
  %s2 = inlined_call_operand.hbm [shape: bf16[8,384], index: 2, kind: output, shape index: {}]
  %s3 = sld [smem:[#allocation0]]
  $region41: #{tpu_custom_call.1} parent=0
    _
  %s5 = ssub.s32 1, %s3
  %s6 = scalar_select 0, %s5, %s3
  $region1: #{tpu_custom_call.1} parent=0
    #allocation2 [shape = 'u8[4096]{0}', space=vmem, size = 0x1000, scoped, tag = 'output window, operand 0']
    #allocation3 [shape = 's32[2]{0}', space=sflag, size = 0x8, scoped, tag = 'scoped memory for tpu_custom_call.1']
    %7 = vsyncpa [#allocation3], 0
    %s8 = scalar_lea.sflag [#allocation3], 1
    %9 = vsyncpa %s8, 0
    loop: start=0, step=1, limit=5
    $region2: #{tpu_custom_call.1} parent=1 // loop_pre_header
      _
    $region3: #{tpu_custom_call.1} parent=1 // loop_header
      %s11 = sphi 0, %s15
      %p12 = scmp.ge.s32.totalorder %s11, 5
      %s18 = sphi 0, %s30
      %s19 = sphi 0, %s26
      %s20 = sphi 0, %s18
      %s21 = sphi 0, %s19
      %s22 = sphi 0, %s20
      %s23 = sphi 0, %s21
      %s33 = sphi 0, %s35
      %s36 = sphi 0, %s33
      %s37 = sphi 0, %s36
      %s53 = sphi 0, %s37
      %s59 = sphi 0, %s61
      %s62 = sphi 0, %s59
      %s63 = sphi 0, %s62
      %s79 = sphi 0, %s63
      %s87 = sphi 0, %s89
      %s90 = sphi 0, %s87
      %s91 = sphi 0, %s90
      %s107 = sphi 0, %s91
    $region4: #{tpu_custom_call.1} parent=1 // loop_header_branch
      %14 = sbr.rel (%p12) target = $region8
    $region5: #{tpu_custom_call.1} parent=1 // loop_body
      %s16 = ssub.s32 %s11, 1
      %s17 = ssub.s32 %s11, 2
      %s24 = sadd.s32 1, %s19
      %p25 = scmp.ge.s32.totalorder %s24, 3
      %s26 = scalar_select %p25, 0, %s24
      %s27 = sadd.s32 1, %s18
      %s28 = scalar_select %p25, %s27, %s18
      %p29 = scmp.ge.s32.totalorder %s28, 1
      %s30 = scalar_select %p29, 0, %s28
      %s31 = ssub.s32 %s18, %s30
      %p32 = scmp.eq.s32.totalorder %s31, 0
      %s34 = sadd.s32 %s33, 1
      %s35 = scalar_select %p32, %s33, %s34
      %p38 = pneg %p32
      %p39 = scmp.eq.s32.totalorder %s11, 2
      %p40 = por %p38, %p39
      %p41 = scmp.ne.s32.totalorder %s33, %s36
      %p42 = scmp.eq.s32.totalorder %s11, 0
      %p43 = por %p41, %p42
      %p44 = scmp.ne.s32.totalorder %s33, %s36
      %p45 = scmp.eq.s32.totalorder %s16, 2
      %p46 = por %p44, %p45
      %p47 = scmp.ne.s32.totalorder %s36, %s37
      %p48 = scmp.eq.s32.totalorder %s16, 0
      %p49 = por %p47, %p48
      %p50 = scmp.ne.s32.totalorder %s36, %s37
      %p51 = scmp.eq.s32.totalorder %s17, 2
      %p52 = por %p50, %p51
      %p54 = scmp.ne.s32.totalorder %s37, %s53
      %p55 = scmp.eq.s32.totalorder %s17, 0
      %p56 = por %p54, %p55
      %s57 = ssub.s32 %s19, %s26
      %p58 = scmp.eq.s32.totalorder %s57, 0
      %s60 = sadd.s32 %s59, 1
      %s61 = scalar_select %p58, %s59, %s60
      %p64 = pneg %p58
      %p65 = scmp.eq.s32.totalorder %s11, 2
      %p66 = por %p64, %p65
      %p67 = scmp.ne.s32.totalorder %s59, %s62
      %p68 = scmp.eq.s32.totalorder %s11, 0
      %p69 = por %p67, %p68
      %p70 = scmp.ne.s32.totalorder %s59, %s62
      %p71 = scmp.eq.s32.totalorder %s16, 2
      %p72 = por %p70, %p71
      %p73 = scmp.ne.s32.totalorder %s62, %s63
      %p74 = scmp.eq.s32.totalorder %s16, 0
      %p75 = por %p73, %p74
      %p76 = scmp.ne.s32.totalorder %s62, %s63
      %p77 = scmp.eq.s32.totalorder %s17, 2
      %p78 = por %p76, %p77
      %p80 = scmp.ne.s32.totalorder %s63, %s79
      %p81 = scmp.eq.s32.totalorder %s17, 0
      %p82 = por %p80, %p81
      %s83 = ssub.s32 %s18, %s30
      %s84 = ssub.s32 %s19, %s26
      %s85 = sor.u32 %s83, %s84
      %p86 = scmp.eq.s32.totalorder %s85, 0
      %s88 = sadd.s32 %s87, 1
      %s89 = scalar_select %p86, %s87, %s88
      %p92 = pneg %p86
      %p93 = scmp.eq.s32.totalorder %s11, 2
      %p94 = por %p92, %p93
      %p95 = scmp.ne.s32.totalorder %s87, %s90
      %p96 = scmp.eq.s32.totalorder %s11, 0
      %p97 = por %p95, %p96
      %p98 = scmp.ne.s32.totalorder %s87, %s90
      %p99 = scmp.eq.s32.totalorder %s16, 2
      %p100 = por %p98, %p99
      %p101 = scmp.ne.s32.totalorder %s90, %s91
      %p102 = scmp.eq.s32.totalorder %s16, 0
      %p103 = por %p101, %p102
      %p104 = scmp.ne.s32.totalorder %s90, %s91
      %p105 = scmp.eq.s32.totalorder %s17, 2
      %p106 = por %p104, %p105
      %p108 = scmp.ne.s32.totalorder %s91, %s107
      %p109 = scmp.eq.s32.totalorder %s17, 0
      %p110 = por %p108, %p109
      %p111 = scmp.le.s32.totalorder 1, %s11
      %p112 = scmp.lt.s32.totalorder %s11, 4
      %p113 = pnand %p111, %p112
      %p114 = pneg %p113
      // Predicated region
      $region9: #{tpu_custom_call.1} parent=5 // pred_check
        _
      $region10: #{tpu_custom_call.1} parent=5 // pred_check_branch
        %116 = sbr.rel (%p113) target = $region12
      $region11: #{tpu_custom_call.1} parent=5 // pred_region
        %s117 = ssub.s32 %s11, 1
        // Predicated region
        $region13: #{tpu_custom_call.1} parent=11 // pred_check
          %p118 = pneg %p49
        $region14: #{tpu_custom_call.1} parent=11 // pred_check_branch
          %120 = sbr.rel (%p118) target = $region16
        $region15: #{tpu_custom_call.1} parent=11 // pred_region
          %p121 = scmp.lt.s32.totalorder %s20, 0
          %s122 = scalar_select %p121, %s20, 0
          %s123 = smul.addr %s122, 8
          %s124 = scalar_lea.vmem %s0, %s123
        $region16: #{tpu_custom_call.1} parent=11 // pred_fallthru
          _
      $region12: #{tpu_custom_call.1} parent=5 // pred_fallthru
        _
      %p125 = scmp.lt.s32.totalorder %s11, 3
      // Predicated region
      $region17: #{tpu_custom_call.1} parent=5 // pred_check
        %p126 = pneg %p125
      $region18: #{tpu_custom_call.1} parent=5 // pred_check_branch
        %128 = sbr.rel (%p126) target = $region20
      $region19: #{tpu_custom_call.1} parent=5 // pred_region
        // Predicated region
        $region21: #{tpu_custom_call.1} parent=19 // pred_check
          %p129 = pneg %p69
        $region22: #{tpu_custom_call.1} parent=19 // pred_check_branch
          %131 = sbr.rel (%p129) target = $region24
        $region23: #{tpu_custom_call.1} parent=19 // pred_region
          %s132 = smul.u32 16, %s19
          %p133 = scmp.lt.s32.totalorder %s132, 47
          %s134 = scalar_select %p133, %s132, 47
          %s135 = smul.addr %s134, 4
          %s136 = scalar_lea.vmem %s1, %s135
          %s137 = smul.u32 16, %s19
        $region24: #{tpu_custom_call.1} parent=19 // pred_fallthru
          _
      $region20: #{tpu_custom_call.1} parent=5 // pred_fallthru
        _
      %p138 = scmp.le.s32.totalorder 1, %s11
      %p139 = scmp.lt.s32.totalorder %s11, 4
      %p140 = pnand %p138, %p139
      %p141 = pneg %p140
      // Predicated region
      $region25: #{tpu_custom_call.1} parent=5 // pred_check
        _
      $region26: #{tpu_custom_call.1} parent=5 // pred_check_branch
        %143 = sbr.rel (%p140) target = $region28
      $region27: #{tpu_custom_call.1} parent=5 // pred_region
        %s144 = ssub.s32 %s11, 1
        %p145 = scmp.lt.s32.totalorder %s20, 0
        %s146 = scalar_select %p145, %s20, 0
        %s147 = smul.addr %s146, 8
        %s148 = scalar_lea.vmem %s0, %s147
        %p149 = pneg %p49
        %p150 = pneg %p46
        %s151 = smul.u32 16, %s21
        %p152 = scmp.lt.s32.totalorder %s151, 47
        %s153 = scalar_select %p152, %s151, 47
        %s154 = smul.addr %s153, 4
        %s155 = scalar_lea.vmem %s1, %s154
        %p156 = pneg %p75
        %p157 = pneg %p72
        %p158 = pneg %p103
        %p159 = pneg %p100
        %s160 = sand.u32 %s90, 1
        %s161 = scalar_lea.sflag [#allocation3], %s160
        %s162 = sand.u32 %s90, 1
        %s163 = smul.addr %s162, 4
        %s164 = scalar_lea.vmem [#allocation2], %s163
        %p165 = scmp.lt.s32.totalorder %s20, 0
        %s166 = scalar_select %p165, %s20, 0
        %s167 = smul.addr %s166, 8
        %s168 = scalar_lea.vmem %s0, %s167
        %s169 = smul.u32 16, %s21
        %p170 = scmp.lt.s32.totalorder %s169, 47
        %s171 = scalar_select %p170, %s169, 47
        %s172 = smul.addr %s171, 4
        %s173 = scalar_lea.vmem %s1, %s172
        %s174 = smul.u32 16, %s21
        %v176 = vld [vmem:[%s168] sm:$0xff]
        %v177 = vpack.c.bf16 %v176, %v176
        %v178 = vld [vmem:[%s173] sm:$0xf]
        %v179 = vld [vmem:[%s173 + $0x4] sm:$0xf]
        %v180 = vld [vmem:[%s173 + $0x8] sm:$0xf]
        %v181 = vld [vmem:[%s173 + $0xc] sm:$0xf]
        %v182 = vld [vmem:[%s173 + $0x10] sm:$0xf]
        %v183 = vld [vmem:[%s173 + $0x14] sm:$0xf]
        %v184 = vld [vmem:[%s173 + $0x18] sm:$0xf]
        %v185 = vld [vmem:[%s173 + $0x1c] sm:$0xf]
        %v186 = vld [vmem:[%s173 + $0x20] sm:$0xf]
        %v187 = vld [vmem:[%s173 + $0x24] sm:$0xf]
        %v188 = vld [vmem:[%s173 + $0x28] sm:$0xf]
        %v189 = vld [vmem:[%s173 + $0x2c] sm:$0xf]
        %v190 = vld [vmem:[%s173 + $0x30] sm:$0xf]
        %v191 = vld [vmem:[%s173 + $0x34] sm:$0xf]
        %v192 = vld [vmem:[%s173 + $0x38] sm:$0xf]
        %v193 = vld [vmem:[%s173 + $0x3c] sm:$0xf]
        %v210 = vunpack.c.l.b16 %v178
        %v211 = vunpack.c.l.b16 %v179
        %v212 = vunpack.c.l.b16 %v180
        %v213 = vunpack.c.l.b16 %v181
        %v214 = vunpack.c.l.b16 %v182
        %v215 = vunpack.c.l.b16 %v183
        %v216 = vunpack.c.l.b16 %v184
        %v217 = vunpack.c.l.b16 %v185
        %v218 = vunpack.c.l.b16 %v186
        %v219 = vunpack.c.l.b16 %v187
        %v220 = vunpack.c.l.b16 %v188
        %v221 = vunpack.c.l.b16 %v189
        %v222 = vunpack.c.l.b16 %v190
        %v223 = vunpack.c.l.b16 %v191
        %v224 = vunpack.c.l.b16 %v192
        %v225 = vunpack.c.l.b16 %v193
        %v226 = vpack.c.b16 %v211, %v210
        %v227 = vpack.c.b16 %v213, %v212
        %v228 = vpack.c.b16 %v215, %v214
        %v229 = vpack.c.b16 %v217, %v216
        %v230 = vpack.c.b16 %v219, %v218
        %v231 = vpack.c.b16 %v221, %v220
        %v232 = vpack.c.b16 %v223, %v222
        %v233 = vpack.c.b16 %v225, %v224
        %vm234 = vcmask 261120
        %v236 = vsel %vm234, %v177, 0
        %v239 = vsel %vm234, %v226, 0
        %v242 = vsel %vm234, %v227, 0
        %v245 = vsel %vm234, %v228, 0
        %v248 = vsel %vm234, %v229, 0
        %v251 = vsel %vm234, %v230, 0
        %v254 = vsel %vm234, %v231, 0
        %v257 = vsel %vm234, %v232, 0
        %v260 = vsel %vm234, %v233, 0
        %262 = vmatprep.subr.bf16.mxu0 0
        %263 = vmatpush1.bf16.xpose.msra.mxu0 %v260
        %264 = vmatprep.subr.bf16.mxu0 0
        %265 = vmatpush1.bf16.xpose.msra.mxu0 %v257
        %266 = vmatprep.subr.bf16.mxu0 0
        %267 = vmatpush1.bf16.xpose.msra.mxu0 %v254
        %268 = vmatprep.subr.bf16.mxu0 0
        %269 = vmatpush1.bf16.xpose.msra.mxu0 %v251
        %270 = vmatprep.subr.bf16.mxu0 0
        %271 = vmatpush1.bf16.xpose.msra.mxu0 %v248
        %272 = vmatprep.subr.bf16.mxu0 0
        %273 = vmatpush1.bf16.xpose.msra.mxu0 %v245
        %274 = vmatprep.subr.bf16.mxu0 0
        %275 = vmatpush1.bf16.xpose.msra.mxu0 %v242
        %276 = vmatprep.subr.bf16.mxu0 0
        %277 = vmatpush1.bf16.xpose.msra.mxu0 %v239
        %278 = vmatprep.subr.bf16.mxu0 0
        %279 = vmatpush2.bf16.xpose.msra.mxu0 0
        %280 = vmatprep.subr.bf16.mxu0 0
        %281 = vmatpush2.bf16.xpose.msra.mxu0 0
        %282 = vmatprep.subr.bf16.mxu0 0
        %283 = vmatpush2.bf16.xpose.msra.mxu0 0
        %284 = vmatprep.subr.bf16.mxu0 0
        %285 = vmatpush2.bf16.xpose.msra.mxu0 0
        %286 = vmatprep.subr.bf16.mxu0 0
        %287 = vmatpush2.bf16.xpose.msra.mxu0 0
        %288 = vmatprep.subr.bf16.mxu0 0
        %289 = vmatpush2.bf16.xpose.msra.mxu0 0
        %290 = vmatprep.subr.bf16.mxu0 0
        %291 = vmatpush2.bf16.xpose.msra.mxu0 0
        %292 = vmatprep.subr.bf16.mxu0 0
        %293 = vmatpush2.bf16.xpose.msra.mxu0 0
        %294 = vmatprep.mubr.bf16.mxu0 0
        %295 = vmatmul.mubr.bf16.gmra.mxu0 %v236
        %v296 = vpop.f32.mrf.mxu0
        %v297 = vadd.f32 0.0, %v296
        %v298 = vpop.f32.mrf.mxu0
        %v299 = vpop.f32.mrf.mxu0
        %v300 = vpop.f32.mrf.mxu0
        %301 = vdwg.mxu0
        %v302 = vpack.c.bf16 %v297, %v297
        %303 = vst [vmem:[%s164] sm:$0xf] %v302
        %s304 = sand.u32 %s90, 1
        %s305 = scalar_lea.sflag [#allocation3], %s304
        %s306 = sand.u32 %s90, 1
        %s307 = smul.addr %s306, 4
        %s308 = scalar_lea.vmem [#allocation2], %s307
        // Predicated region
        $region29: #{tpu_custom_call.1} parent=27 // pred_check
          %p309 = pneg %p100
        $region30: #{tpu_custom_call.1} parent=27 // pred_check_branch
          %311 = sbr.rel (%p309) target = $region32
        $region31: #{tpu_custom_call.1} parent=27 // pred_region
          %s313 = ssub.s32 64, 64
          %314 = vsyncadd %s305, %s313
          %s315 = smul.addr %s20, 3
          %s316 = sadd.s32 %s21, %s315
          %s317 = smul.addr %s316, 64
          %s318 = scalar_lea.hbm %s2, %s317
          %s320 = sshll.u32 %s308, 4
          %s321 = int_to_ptr.vmem [resolvable:$true] %s320
          %323 = dma.vmem_to_hbm [thread:$0]  %s321, 64, %s318, %s305
        $region32: #{tpu_custom_call.1} parent=27 // pred_fallthru
          _
      $region28: #{tpu_custom_call.1} parent=5 // pred_fallthru
        _
      %p324 = scmp.le.s32.totalorder 2, %s11
      // Predicated region
      $region33: #{tpu_custom_call.1} parent=5 // pred_check
        %p325 = pneg %p324
      $region34: #{tpu_custom_call.1} parent=5 // pred_check_branch
        %327 = sbr.rel (%p325) target = $region36
      $region35: #{tpu_custom_call.1} parent=5 // pred_region
        %s328 = ssub.s32 %s11, 2
        // Predicated region
        $region37: #{tpu_custom_call.1} parent=35 // pred_check
          %p329 = pneg %p106
        $region38: #{tpu_custom_call.1} parent=35 // pred_check_branch
          %331 = sbr.rel (%p329) target = $region40
        $region39: #{tpu_custom_call.1} parent=35 // pred_region
          %s332 = sand.u32 %s91, 1
          %s333 = scalar_lea.sflag [#allocation3], %s332
          %s334 = sand.u32 %s91, 1
          %s335 = smul.addr %s334, 4
          %s336 = scalar_lea.vmem [#allocation2], %s335
          %337 = dma.done %s333, 64
        $region40: #{tpu_custom_call.1} parent=35 // pred_fallthru
          _
      $region36: #{tpu_custom_call.1} parent=5 // pred_fallthru
        _
    $region6: #{tpu_custom_call.1} parent=1 // loop_footer
      %s15 = sadd.s32 1, %s11
    $region7: #{tpu_custom_call.1} parent=1 // loop_footer_branch
      %10 = sbr.rel target = $region3
    $region8: #{tpu_custom_call.1} parent=1 // loop_exit
      _
    %338 = vsyncpa [#allocation3], 1
    %s339 = scalar_lea.sflag [#allocation3], 1
    %340 = vsyncpa %s339, 1

</llo_original>
